<compile_context>
chip_gen: v6e
topology: v6e:2x2x1
jax: 0.10.0
libtpu: 0.0.40
codegen_flags: <defaults>
</compile_context>

<pallas_src>
import functools

import jax
import jax.numpy as jnp
from jax import lax
from jax.experimental import pallas as pl
from jax.experimental.pallas import tpu as pltpu

LANE = 128
ROW_SUB = 16                        # second-minor = 16: native bf16 tile; fine for f32
ROW_ELEMS = ROW_SUB * LANE          # 2048 elements per slab row
CHUNK_ROWS = 4                      # inner-loop chunk: 4 rows = 8 f32 vregs per input


def _qfocal_elementwise(x, y, gamma, alpha, approx_recip=False):
    """Element-wise QFocal loss in f32. approx_recip=True only valid inside a kernel."""
    e = jnp.exp(-jnp.abs(x))                           # single EUP exp, reused below
    bce = jnp.maximum(x, 0.0) - x * y + jnp.log1p(e)   # stable BCE-with-logits
    denom = 1.0 + e
    if approx_recip:
        r = pl.reciprocal(denom, approx=True)          # EUP vrcp, frees the divide
    else:
        r = 1.0 / denom
    prob = jnp.where(x >= 0.0, r, e * r)               # sigmoid(x), reusing e
    alpha_factor = y * alpha + (1.0 - y) * (1.0 - alpha)
    d = jnp.abs(y - prob)
    # gamma is a Python float -> branch at trace time; avoid jnp.power (log+exp).
    if gamma == 1.5:
        mod = d * jnp.sqrt(d)
    elif gamma == 2.0:
        mod = d * d
    elif gamma == 1.0:
        mod = d
    elif gamma == 0.5:
        mod = jnp.sqrt(d)
    elif gamma == 0.0:
        mod = jnp.ones_like(d)
    else:
        mod = jnp.power(d, gamma)
    return bce * alpha_factor * mod


def _qfocal_partial_kernel(pred_ref, true_ref, psum_ref, *, gamma, alpha, chunk,
                           tile_rows, total_rows, mask_tail, approx_recip):
    """mean/sum path: accumulate a (16,128) partial sum per block (no loss-map write)."""
    blk0 = pl.program_id(0) * tile_rows

    def chunk_sum(row0, rows):
        x = pred_ref[pl.ds(row0, rows)].astype(jnp.float32)
        y = true_ref[pl.ds(row0, rows)].astype(jnp.float32)
        loss = _qfocal_elementwise(x, y, gamma, alpha, approx_recip)
        if mask_tail:  # last grid block extends past the array: mask its padded rows
            rid = blk0 + row0 + lax.broadcasted_iota(jnp.int32, loss.shape, 0)
            loss = jnp.where(rid < total_rows, loss, 0.0)
        return jnp.sum(loss, axis=0)            # VPU adds over the chunk's leading axis

    nfull = tile_rows // chunk
    rem_rows = tile_rows - nfull * chunk
    acc = jnp.zeros((ROW_SUB, LANE), jnp.float32)
    if nfull:
        def body(c, a):
            return a + chunk_sum(pl.multiple_of(c * chunk, chunk), chunk)
        acc = lax.fori_loop(0, nfull, body, acc, unroll=2)
    if rem_rows:
        acc = acc + chunk_sum(nfull * chunk, rem_rows)
    psum_ref[...] = acc[None, :, :]


def _qfocal_map_kernel(pred_ref, true_ref, out_ref, *, gamma, alpha, chunk,
                       tile_rows, approx_recip):
    """'none' path: write the element-wise loss map chunk by chunk."""
    def do(row0, rows):
        x = pred_ref[pl.ds(row0, rows)].astype(jnp.float32)
        y = true_ref[pl.ds(row0, rows)].astype(jnp.float32)
        out_ref[pl.ds(row0, rows)] = _qfocal_elementwise(
            x, y, gamma, alpha, approx_recip).astype(out_ref.dtype)

    nfull = tile_rows // chunk
    rem_rows = tile_rows - nfull * chunk
    if nfull:
        @pl.loop(0, nfull)
        def _(c):
            do(pl.multiple_of(c * chunk, chunk), chunk)
    if rem_rows:
        do(nfull * chunk, rem_rows)


def _tile_config(n_rows):
    """Per-generation tile (in rows of 16x128) and optional explicit VMEM ceiling."""
    try:
        kind = jax.devices()[0].device_kind.lower()
    except Exception:  # pragma: no cover
        kind = ""
    two_tc = "7" in kind                          # v7x: 2 TensorCores per chip
    if "v5" in kind:
        max_rows, vmem_limit = 128, None          # 1 MiB f32/input/step; 16 MiB default
    elif "v6" in kind:
        max_rows, vmem_limit = 256, None          # 2 MiB f32/input/step; 32 MiB default
    elif two_tc:
        max_rows, vmem_limit = 512, 48 * 1024 * 1024   # 4 MiB f32/input/step on v7x
    else:
        max_rows, vmem_limit = 128, None          # unknown / older: stay conservative
    tile_rows = max(1, min(max_rows, n_rows))
    if two_tc and n_rows >= 2:
        tile_rows = min(tile_rows, pl.cdiv(n_rows, 2))  # >= 2 blocks so both TCs work
    return tile_rows, vmem_limit


def qfocal_loss(pred, true, gamma=1.5, alpha=0.25, reduction='mean', *, _tile_rows=None):
    """QFocalLoss.forward with loss_fcn = nn.BCEWithLogitsLoss(reduction=reduction)."""
    orig_shape = pred.shape
    n = int(pred.size)
    gamma = float(gamma)
    alpha = float(alpha)

    out_dtype = jnp.promote_types(pred.dtype, true.dtype)
    if not jnp.issubdtype(out_dtype, jnp.floating):
        out_dtype = jnp.float32

    def _keep(a):
        # bf16/f32 go through the pallas_call as-is (bf16 halves input HBM bytes);
        # everything else is upcast once to f32.
        return a if a.dtype in (jnp.bfloat16, jnp.float32) else a.astype(jnp.float32)

    flat_p = _keep(pred).reshape(-1)              # contiguous reshape: free
    flat_t = _keep(true).reshape(-1)
    approx_recip = (flat_p.dtype == jnp.bfloat16 and flat_t.dtype == jnp.bfloat16)

    n_rows = n // ROW_ELEMS
    rem = n - n_rows * ROW_ELEMS

    # Sub-row tail (< 2048 elements): plain XLA instead of padding the whole array.
    tail_loss = None
    if rem:
        tp = flat_p[n_rows * ROW_ELEMS:].astype(jnp.float32)
        tt = flat_t[n_rows * ROW_ELEMS:].astype(jnp.float32)
        tail_loss = _qfocal_elementwise(tp, tt, gamma, alpha)

    if n_rows == 0:                               # tiny input: everything is tail
        if reduction == 'mean':
            return jnp.sum(tail_loss) / n
        if reduction == 'sum':
            return jnp.sum(tail_loss)
        return tail_loss.astype(out_dtype).reshape(orig_shape)

    main_elems = n_rows * ROW_ELEMS
    # rem == 0: pure reshape, zero-copy.  rem > 0: bounded prefix slice (cheaper than
    # the old full-array pad + tile-multiple rounding).
    p_main = flat_p if rem == 0 else flat_p[:main_elems]
    t_main = flat_t if rem == 0 else flat_t[:main_elems]
    p3 = p_main.reshape(n_rows, ROW_SUB, LANE)
    t3 = t_main.reshape(n_rows, ROW_SUB, LANE)

    if _tile_rows is None:
        tile_rows, vmem_limit = _tile_config(n_rows)
    else:                                         # test hook: force a tile size
        tile_rows, vmem_limit = max(1, min(int(_tile_rows), n_rows)), None
    num_blocks = pl.cdiv(n_rows, tile_rows)
    partial_last = (n_rows % tile_rows) != 0

    in_specs = [pl.BlockSpec((tile_rows, ROW_SUB, LANE), lambda i: (i, 0, 0)),
                pl.BlockSpec((tile_rows, ROW_SUB, LANE), lambda i: (i, 0, 0))]
    cparams = pltpu.CompilerParams(dimension_semantics=("parallel",),
                                   vmem_limit_bytes=vmem_limit)

    if reduction in ('mean', 'sum'):
        kernel = functools.partial(
            _qfocal_partial_kernel, gamma=gamma, alpha=alpha, chunk=CHUNK_ROWS,
            tile_rows=tile_rows, total_rows=n_rows, mask_tail=partial_last,
            approx_recip=approx_recip)
        partials = pl.pallas_call(
            kernel,
            out_shape=jax.ShapeDtypeStruct((num_blocks, ROW_SUB, LANE), jnp.float32),
            grid_spec=pltpu.PrefetchScalarGridSpec(
                num_scalar_prefetch=0,
                grid=(num_blocks,),
                in_specs=in_specs,
                out_specs=pl.BlockSpec((1, ROW_SUB, LANE), lambda i: (i, 0, 0)),
            ),
            compiler_params=cparams,
        )(p3, t3)
        loss_sum = jnp.sum(partials)              # tiny final reduce in XLA
        if rem:
            loss_sum = loss_sum + jnp.sum(tail_loss)
        if reduction == 'mean':
            return loss_sum / n
        return loss_sum

    # reduction == 'none' (and any other reduction string, matching the torch module)
    kernel = functools.partial(
        _qfocal_map_kernel, gamma=gamma, alpha=alpha, chunk=CHUNK_ROWS,
        tile_rows=tile_rows, approx_recip=approx_recip)
    main = pl.pallas_call(
        kernel,
        out_shape=jax.ShapeDtypeStruct((n_rows, ROW_SUB, LANE), out_dtype),
        grid_spec=pltpu.PrefetchScalarGridSpec(
            num_scalar_prefetch=0,
            grid=(num_blocks,),
            in_specs=in_specs,
            out_specs=pl.BlockSpec((tile_rows, ROW_SUB, LANE), lambda i: (i, 0, 0)),
        ),
        compiler_params=cparams,
    )(p3, t3)
    flat_out = main.reshape(-1)                   # free (contiguous)
    if rem:
        flat_out = jnp.concatenate([flat_out, tail_loss.astype(out_dtype)])
    return flat_out.reshape(orig_shape)


def _qfocal_ref(pred, true, gamma=1.5, alpha=0.25, reduction='mean'):
    """Pure-JAX reference mirroring the PyTorch module."""
    x = pred.astype(jnp.float32)
    y = true.astype(jnp.float32)
    bce = jnp.maximum(x, 0.0) - x * y + jnp.log1p(jnp.exp(-jnp.abs(x)))
    p = jax.nn.sigmoid(x)
    alpha_factor = y * alpha + (1.0 - y) * (1.0 - alpha)
    modulating_factor = jnp.abs(y - p) ** gamma
    loss = bce * alpha_factor * modulating_factor
    if reduction == 'mean':
        return loss.mean()
    elif reduction == 'sum':
        return loss.sum()
    return loss


if __name__ == "__main__":
    key = jax.random.PRNGKey(0)
    k1, k2, k3, k4 = jax.random.split(key, 4)
    gamma, alpha = 1.5, 0.25          # module __init__ defaults

    # Case 1: 2*4*16*16 = 2048 elements = exactly one (16,128) row (zero-copy path).
    pred1 = jax.random.normal(k1, (2, 4, 16, 16), dtype=jnp.float32)
    true1 = jax.random.uniform(k2, (2, 4, 16, 16), dtype=jnp.float32)

    # Case 2: 3*4*40*40 = 19200 elements -> 9 rows + 768-element XLA tail;
    # forcing tile_rows=4 exercises the partial-last-block masking / write clipping.
    pred2 = jax.random.normal(k3, (3, 4, 40, 40), dtype=jnp.float32)
    true2 = jax.random.uniform(k4, (3, 4, 40, 40), dtype=jnp.float32)

    results = []
    for (p, t), tr in (((pred1, true1), None), ((pred2, true2), 4)):
        for red in ("mean", "sum", "none"):
            out = qfocal_loss(p, t, gamma, alpha, red, _tile_rows=tr)
            ref = _qfocal_ref(p, t, gamma, alpha, red)
            out, ref = jax.block_until_ready((out, ref))
            assert out.shape == ref.shape, (red, out.shape, ref.shape)
            assert jnp.allclose(out, ref, rtol=1e-4, atol=1e-6), (red, out, ref)
            results.append(out)

    # bf16 inputs exercise the approx-reciprocal sigmoid path inside the kernel.
    pb, tb = pred2.astype(jnp.bfloat16), true2.astype(jnp.bfloat16)
    out_bf = qfocal_loss(pb, tb, gamma, alpha, "mean")
    ref_bf = _qfocal_ref(pb, tb, gamma, alpha, "mean")
    out_bf, ref_bf = jax.block_until_ready((out_bf, ref_bf))
    assert jnp.allclose(out_bf, ref_bf, rtol=1e-2, atol=1e-4), (out_bf, ref_bf)

    jax.block_until_ready(results)
    print("KERNEL_OK")
</pallas_src>

<mosaic_0001>
module attributes {stable_mosaic.version = 11 : i64} {
  func.func @_qfocal_partial_kernel(%arg0: i32, %arg1: memref<1x16x128xf32, #tpu.memory_space<vmem>>, %arg2: memref<1x16x128xf32, #tpu.memory_space<vmem>>, %arg3: memref<1x16x128xf32, #tpu.memory_space<vmem>>) attributes {dimension_semantics = [#tpu.dimension_semantics<parallel>], iteration_bounds = array<i64: 1>, scalar_prefetch = 0 : i64, scratch_operands = 0 : i64, tpu.core_type = #tpu.core_type<tc>, window_params = [{transform_indices = @transform_0, window_bounds = array<i64: 1, 16, 128>}, {transform_indices = @transform_1, window_bounds = array<i64: 1, 16, 128>}, {transform_indices = @transform_2, window_bounds = array<i64: 1, 16, 128>}]} {
    %cst = arith.constant 0.000000e+00 : f32
    %0 = vector.broadcast %cst : f32 to vector<16x128xf32>
    %c0 = arith.constant 0 : index
    %c0_0 = arith.constant 0 : index
    %c0_1 = arith.constant 0 : index
    %1 = vector.load %arg1[%c0, %c0_0, %c0_1] : memref<1x16x128xf32, #tpu.memory_space<vmem>>, vector<1x16x128xf32>
    %c0_2 = arith.constant 0 : index
    %c0_3 = arith.constant 0 : index
    %c0_4 = arith.constant 0 : index
    %2 = vector.load %arg2[%c0_2, %c0_3, %c0_4] : memref<1x16x128xf32, #tpu.memory_space<vmem>>, vector<1x16x128xf32>
    %3 = math.absf %1 : vector<1x16x128xf32>
    %cst_5 = arith.constant 0.000000e+00 : f32
    %4 = vector.broadcast %cst_5 : f32 to vector<1x16x128xf32>
    %5 = arith.subf %4, %3 : vector<1x16x128xf32>
    %6 = math.exp %5 : vector<1x16x128xf32>
    %cst_6 = arith.constant 0.000000e+00 : f32
    %7 = vector.broadcast %cst_6 : f32 to vector<1x16x128xf32>
    %8 = arith.maximumf %1, %7 : vector<1x16x128xf32>
    %9 = arith.mulf %1, %2 : vector<1x16x128xf32>
    %10 = arith.subf %8, %9 : vector<1x16x128xf32>
    %11 = math.log1p %6 : vector<1x16x128xf32>
    %12 = arith.addf %10, %11 : vector<1x16x128xf32>
    %cst_7 = arith.constant 1.000000e+00 : f32
    %13 = vector.broadcast %cst_7 : f32 to vector<1x16x128xf32>
    %14 = arith.addf %13, %6 : vector<1x16x128xf32>
    %cst_8 = arith.constant 1.000000e+00 : f32
    %15 = vector.broadcast %cst_8 : f32 to vector<1x16x128xf32>
    %16 = arith.divf %15, %14 : vector<1x16x128xf32>
    %cst_9 = arith.constant 0.000000e+00 : f32
    %17 = vector.broadcast %cst_9 : f32 to vector<1x16x128xf32>
    %18 = arith.cmpf oge, %1, %17 : vector<1x16x128xf32>
    %19 = arith.mulf %6, %16 : vector<1x16x128xf32>
    %20 = arith.select %18, %16, %19 : vector<1x16x128xi1>, vector<1x16x128xf32>
    %cst_10 = arith.constant 2.500000e-01 : f32
    %21 = vector.broadcast %cst_10 : f32 to vector<1x16x128xf32>
    %22 = arith.mulf %2, %21 : vector<1x16x128xf32>
    %cst_11 = arith.constant 1.000000e+00 : f32
    %23 = vector.broadcast %cst_11 : f32 to vector<1x16x128xf32>
    %24 = arith.subf %23, %2 : vector<1x16x128xf32>
    %cst_12 = arith.constant 7.500000e-01 : f32
    %25 = vector.broadcast %cst_12 : f32 to vector<1x16x128xf32>
    %26 = arith.mulf %24, %25 : vector<1x16x128xf32>
    %27 = arith.addf %22, %26 : vector<1x16x128xf32>
    %28 = arith.subf %2, %20 : vector<1x16x128xf32>
    %29 = math.absf %28 : vector<1x16x128xf32>
    %30 = math.sqrt %29 : vector<1x16x128xf32>
    %31 = arith.mulf %29, %30 : vector<1x16x128xf32>
    %32 = arith.mulf %12, %27 : vector<1x16x128xf32>
    %33 = arith.mulf %32, %31 : vector<1x16x128xf32>
    %cst_13 = arith.constant dense<0.000000e+00> : vector<16x128xf32>
    %34 = vector.multi_reduction <add>, %33, %cst_13 [0] : vector<1x16x128xf32> to vector<16x128xf32>
    %35 = arith.addf %0, %34 : vector<16x128xf32>
    %36 = vector.shape_cast %35 : vector<16x128xf32> to vector<1x16x128xf32>
    %c0_14 = arith.constant 0 : index
    %c0_15 = arith.constant 0 : index
    %c0_16 = arith.constant 0 : index
    %37 = vector.load %arg3[%c0_14, %c0_15, %c0_16] : memref<1x16x128xf32, #tpu.memory_space<vmem>>, vector<1x16x128xf32>
    tpu.vector_store %arg3[%c0_14, %c0_15, %c0_16], %36 {strides = array<i32>} : memref<1x16x128xf32, #tpu.memory_space<vmem>>, vector<1x16x128xf32>,
    return
  }
  func.func @transform_0(%arg0: i32) -> (i32, i32, i32) {
    %c0_i32 = arith.constant 0 : i32
    %c0_i32_0 = arith.constant 0 : i32
    %c0_i32_1 = arith.constant 0 : i32
    return %arg0, %c0_i32, %c0_i32_0 : i32, i32, i32
  }
  func.func @transform_1(%arg0: i32) -> (i32, i32, i32) {
    %c0_i32 = arith.constant 0 : i32
    %c0_i32_0 = arith.constant 0 : i32
    %c0_i32_1 = arith.constant 0 : i32
    return %arg0, %c0_i32, %c0_i32_0 : i32, i32, i32
  }
  func.func @transform_2(%arg0: i32) -> (i32, i32, i32) {
    %c0_i32 = arith.constant 0 : i32
    %c0_i32_0 = arith.constant 0 : i32
    %c0_i32_1 = arith.constant 0 : i32
    return %arg0, %c0_i32, %c0_i32_0 : i32, i32, i32
  }
}

</mosaic_0001>

<llo_original>
// kernel: tpu_custom_call.1
$region0: #{tpu_custom_call.1}
  #allocation0 [shape = 'u32[]', space=smem, size = 0x4, offset = 0x4, fixed_abs, tag = 'smem constant byte address 0x4 - core index']
  #allocation1 [shape = 'u32[144,128]{1,0:T(1,128)}', space=vmem, size = 0x12000, scoped, tag = 'internal scratch']
  %s0 = inlined_call_operand.hbm [shape: f32[1,16,128], index: 0, kind: input, shape index: {}]
  %s1 = inlined_call_operand.hbm [shape: f32[1,16,128], index: 1, kind: input, shape index: {}]
  %s2 = inlined_call_operand.hbm [shape: f32[1,16,128], index: 2, kind: output, shape index: {}]
  %s3 = sld [smem:[#allocation0]]
  $region26: #{tpu_custom_call.1} parent=0
    _
  %s5 = ssub.s32 1, %s3
  %s6 = scalar_select 0, %s5, %s3
  $region1: #{tpu_custom_call.1} parent=0
    #allocation2 [shape = 'u8[8192]{0}', space=vmem, size = 0x2000, scoped, tag = 'input window, operand 0, single buffered']
    #allocation3 [shape = 's32[1]{0}', space=sflag, size = 0x4, scoped, tag = 'scoped memory for tpu_custom_call.1']
    #allocation4 [shape = 's32[1]{0}', space=sflag, size = 0x4, scoped, tag = 'scoped memory for tpu_custom_call.1']
    #allocation5 [shape = 'u8[8192]{0}', space=vmem, size = 0x2000, scoped, tag = 'input window, operand 1, single buffered']
    #allocation6 [shape = 's32[1]{0}', space=sflag, size = 0x4, scoped, tag = 'scoped memory for tpu_custom_call.1']
    #allocation7 [shape = 'u8[8192]{0}', space=vmem, size = 0x2000, scoped, tag = 'output window, operand 0, single buffered']
    %7 = vsyncpa [#allocation3], 0
    %8 = vsyncpa [#allocation6], 0
    %9 = vsyncpa [#allocation4], 0
    // Predicated region
    $region2: #{tpu_custom_call.1} parent=1 // pred_check
      _
    $region3: #{tpu_custom_call.1} parent=1 // pred_check_branch
      %11 = sbr.rel (0) target = $region5
    $region4: #{tpu_custom_call.1} parent=1 // pred_region
      %s13 = ssub.s32 256, 256
      %14 = vsyncadd [#allocation3], %s13
      %s15 = sshll.u32 [#allocation2], 4
      %s16 = int_to_ptr.vmem [resolvable:$true] %s15
      %21 = dma.hbm_to_vmem [thread:$0]  %s0, 256, %s16, [#allocation3], 128, 128, 8
    $region5: #{tpu_custom_call.1} parent=1 // pred_fallthru
      _
    // Predicated region
    $region6: #{tpu_custom_call.1} parent=1 // pred_check
      _
    $region7: #{tpu_custom_call.1} parent=1 // pred_check_branch
      %23 = sbr.rel (0) target = $region9
    $region8: #{tpu_custom_call.1} parent=1 // pred_region
      %s25 = ssub.s32 256, 256
      %26 = vsyncadd [#allocation6], %s25
      %s27 = sshll.u32 [#allocation5], 4
      %s28 = int_to_ptr.vmem [resolvable:$true] %s27
      %33 = dma.hbm_to_vmem [thread:$0]  %s1, 256, %s28, [#allocation6], 128, 128, 8
    $region9: #{tpu_custom_call.1} parent=1 // pred_fallthru
      _
    // Predicated region
    $region10: #{tpu_custom_call.1} parent=1 // pred_check
      _
    $region11: #{tpu_custom_call.1} parent=1 // pred_check_branch
      %35 = sbr.rel (0) target = $region13
    $region12: #{tpu_custom_call.1} parent=1 // pred_region
      %36 = dma.done [#allocation3], 256
    $region13: #{tpu_custom_call.1} parent=1 // pred_fallthru
      _
    // Predicated region
    $region14: #{tpu_custom_call.1} parent=1 // pred_check
      _
    $region15: #{tpu_custom_call.1} parent=1 // pred_check_branch
      %38 = sbr.rel (0) target = $region17
    $region16: #{tpu_custom_call.1} parent=1 // pred_region
      %39 = dma.done [#allocation6], 256
    $region17: #{tpu_custom_call.1} parent=1 // pred_fallthru
      _
    %v40 = vld [vmem:[#allocation2] sm:$0xff]
    %v41 = vld [vmem:[#allocation2 + $0x8] sm:$0xff]
    %v42 = vld [vmem:[#allocation5] sm:$0xff]
    %v43 = vld [vmem:[#allocation5 + $0x8] sm:$0xff]
    %v44 = vand.u32 2147483647, %v40
    %v45 = vand.u32 2147483647, %v41
    %v46 = vsub.f32 0.0, %v44
    %v47 = vsub.f32 0.0, %v45
    %v48 = vmul.f32 %v46, 1.442695
    %v49 = vpow.pop %v48
    %v50 = vmul.f32 %v47, 1.442695
    %v51 = vpow.pop %v50
    %v52 = vmax.f32 %v40, 0.0
    %v53 = vmax.f32 %v41, 0.0
    %v54 = vmul.f32 %v40, %v42
    %v55 = vmul.f32 %v41, %v43
    %v56 = vsub.f32 %v52, %v54
    %v57 = vsub.f32 %v53, %v55
    %v58 = vadd.f32 %v49, 1.0
    %v59 = vlog2.pop %v58
    %v60 = vmul.f32 %v59, 0.6931472
    %v61 = vmul.f32 -0.5, %v49
    %v62 = vadd.f32 %v61, 1.0
    %v63 = vmul.f32 %v62, %v49
    %v64 = vand.u32 2147483647, %v49
    %vm65 = vcmp.lt.f32.partialorder %v64, 0.0004427343
    %v66 = vsel %vm65, %v63, %v60
    %v67 = vadd.f32 %v51, 1.0
    %v68 = vlog2.pop %v67
    %v69 = vmul.f32 %v68, 0.6931472
    %v70 = vmul.f32 -0.5, %v51
    %v71 = vadd.f32 %v70, 1.0
    %v72 = vmul.f32 %v71, %v51
    %v73 = vand.u32 2147483647, %v51
    %vm74 = vcmp.lt.f32.partialorder %v73, 0.0004427343
    %v75 = vsel %vm74, %v72, %v69
    %v76 = vadd.f32 %v56, %v66
    %v77 = vadd.f32 %v57, %v75
    %v78 = vadd.f32 %v49, 1.0
    %v79 = vadd.f32 %v51, 1.0
    %v80 = vrcp.pop %v78
    %v81 = vmul.f32 1.0, %v80
    %v82 = vrcp.pop %v79
    %v83 = vmul.f32 1.0, %v82
    %vm84 = vcmp.ge.f32.partialorder %v40, 0.0
    %vm85 = vcmp.ge.f32.partialorder %v41, 0.0
    %v86 = vmul.f32 %v49, %v81
    %v87 = vmul.f32 %v51, %v83
    %v88 = vsel %vm84, %v81, %v86
    %v89 = vsel %vm85, %v83, %v87
    %v90 = vmul.f32 %v42, 0.25
    %v91 = vmul.f32 %v43, 0.25
    %v92 = vsub.f32 1.0, %v42
    %v93 = vsub.f32 1.0, %v43
    %v94 = vmul.f32 %v92, 0.75
    %v95 = vmul.f32 %v93, 0.75
    %v96 = vadd.f32 %v90, %v94
    %v97 = vadd.f32 %v91, %v95
    %v98 = vsub.f32 %v42, %v88
    %v99 = vsub.f32 %v43, %v89
    %v100 = vand.u32 2147483647, %v98
    %v101 = vand.u32 2147483647, %v99
    %v102 = vrsqrt.pop %v100
    %v103 = vmul.f32 %v100, %v102
    %vm104 = vcmp.eq.f32.partialorder %v100, inf
    %v105 = vsel %vm104, %v100, %v103
    %vm106 = vcmp.eq.f32.partialorder %v100, 0.0
    %v107 = vand.u32 %v100, 2147483648
    %v108 = vsel %vm106, %v107, %v105
    %v109 = vrsqrt.pop %v101
    %v110 = vmul.f32 %v101, %v109
    %vm111 = vcmp.eq.f32.partialorder %v101, inf
    %v112 = vsel %vm111, %v101, %v110
    %vm113 = vcmp.eq.f32.partialorder %v101, 0.0
    %v114 = vand.u32 %v101, 2147483648
    %v115 = vsel %vm113, %v114, %v112
    %v116 = vmul.f32 %v100, %v108
    %v117 = vmul.f32 %v101, %v115
    %v118 = vmul.f32 %v76, %v96
    %v119 = vmul.f32 %v77, %v97
    %v120 = vmul.f32 %v118, %v116
    %v121 = vmul.f32 %v119, %v117
    %v122 = vadd.f32 %v120, 0.0
    %v123 = vadd.f32 %v121, 0.0
    %v124 = vadd.f32 %v122, 0.0
    %v125 = vadd.f32 %v123, 0.0
    %126 = vst [vmem:[#allocation7] sm:$0xff] %v124
    %127 = vst [vmem:[#allocation7 + $0x8] sm:$0xff] %v125
    // Predicated region
    $region18: #{tpu_custom_call.1} parent=1 // pred_check
      _
    $region19: #{tpu_custom_call.1} parent=1 // pred_check_branch
      %129 = sbr.rel (0) target = $region21
    $region20: #{tpu_custom_call.1} parent=1 // pred_region
      %s131 = ssub.s32 256, 256
      %132 = vsyncadd [#allocation4], %s131
      %s133 = sshll.u32 [#allocation7], 4
      %s134 = int_to_ptr.vmem [resolvable:$true] %s133
      %139 = dma.vmem_to_hbm [thread:$0]  %s134, 256, %s2, [#allocation4], 128, 128, 8
    $region21: #{tpu_custom_call.1} parent=1 // pred_fallthru
      _
    // Predicated region
    $region22: #{tpu_custom_call.1} parent=1 // pred_check
      _
    $region23: #{tpu_custom_call.1} parent=1 // pred_check_branch
      %141 = sbr.rel (0) target = $region25
    $region24: #{tpu_custom_call.1} parent=1 // pred_region
      %142 = dma.done [#allocation4], 256
    $region25: #{tpu_custom_call.1} parent=1 // pred_fallthru
      _
    %143 = vsyncpa [#allocation3], 1
    %144 = vsyncpa [#allocation6], 1
    %145 = vsyncpa [#allocation4], 1

</llo_original>
